<compile_context>
chip_gen: v5e
topology: v5e:2x2
jax: 0.10.0
libtpu: 0.0.40
codegen_flags: <defaults>
</compile_context>

<pallas_src>
import jax
import jax.numpy as jnp
import numpy as np
from jax.experimental import pallas as pl
from jax.experimental.pallas import tpu as pltpu


def _luong_kernel(dec_feat_ref, enc_out_ref, enc_feat_ref, mask_ref, cov_ref,
                  w_c_row_ref, v_row_ref, ctx_ref, att_ref, cov_out_ref):
    # One grid step == one block of b_blk batch rows, full T resident in VMEM.
    dec_feat = dec_feat_ref[...].astype(jnp.float32)          # (Bb, 2H)
    enc_feat = enc_feat_ref[...].astype(jnp.float32)          # (Bb, T, 2H)
    cov = cov_ref[...]                                        # (Bb, T)

    # attention_features = enc_feat + dec_feat + W_c(coverage); math kept in f32
    # after the (possibly bf16) load — v5e VPU/EUP has no bf16 path.
    attn_feat = enc_feat + dec_feat[:, None, :]               # broadcast over T
    attn_feat = attn_feat + cov[:, :, None] * w_c_row_ref[...]  # (Bb,T,1)*(1,2H)
    attn_feat = jnp.tanh(attn_feat)

    # scores = V(attention_features): VPU multiply + lane reduce -> (Bb, T)
    scores = jnp.sum(attn_feat * v_row_ref[...], axis=-1)

    # masked_fill(mask, -inf); large finite negative avoids NaN on all-pad rows.
    scores = jnp.where(mask_ref[...] > 0.5, jnp.float32(-1e30), scores)

    # softmax over T (lane axis)
    m = jnp.max(scores, axis=-1, keepdims=True)               # (Bb, 1)
    e = jnp.exp(scores - m)                                   # (Bb, T)
    att = e / jnp.sum(e, axis=-1, keepdims=True)              # (Bb, T)

    # context = bmm(att.unsqueeze(1), encoder_out).squeeze(1) -> (Bb, 2H)
    enc_out = enc_out_ref[...].astype(jnp.float32)            # (Bb, T, 2H)
    ctx_ref[...] = jnp.sum(att[:, :, None] * enc_out, axis=1)

    att_ref[...] = att
    cov_out_ref[...] = cov + att                              # coverage update


def _vmem_budget_bytes():
    """Generation-aware scoped-VMEM budget (physical capacity minus ~15%)."""
    try:
        cap = int(pltpu.get_tpu_info().vmem_capacity_bytes)
    except Exception:
        cap = 64 << 20                    # conservative fallback (v7x per-TC size)
    return (cap * 85) // 100              # ~54 MiB on v7x, ~108 MiB on v5e/v6e


def _step_vmem_bytes(bb, T, H2, enc_itemsize):
    """Per-grid-step VMEM footprint estimate for batch block size bb."""
    enc_stream = 2 * bb * T * H2 * enc_itemsize          # enc_out + enc_feat blocks
    small_io = 4 * (2 * bb * H2 + 4 * bb * T)            # dec_feat/ctx + mask/cov/att/cov_new
    weights = 4 * (2 * H2)                               # W_c + V rows (constant index: 1 copy)
    interm = 4 * 4 * bb * T * H2                         # f32 intermediates (attn_feat etc.)
    return 2 * (enc_stream + small_io) + weights + interm  # double-buffered streams


def _pick_b_blk(B, T, H2, enc_itemsize, budget):
    """Pick the largest batch block that fits the budget (multiple of 8, or B)."""
    if B % 8 != 0 and _step_vmem_bytes(B, T, H2, enc_itemsize) <= budget:
        return B, B                       # whole batch in one block, no padding
    B_pad = ((B + 7) // 8) * 8
    cands = [c for c in range(8, min(B_pad, 256) + 1, 8) if B_pad % c == 0]
    fits = [c for c in cands if _step_vmem_bytes(c, T, H2, enc_itemsize) <= budget]
    if not fits:
        fits = [8]  # TODO(synk): T-tiled two-pass loop for very long T on v7x
    multi = [c for c in fits if B_pad // c >= 2] or fits  # prefer >=2 steps (dual-TC)
    return max(multi), B_pad


def luong_attention(s_t, encoder_out, encoder_hs_features, enc_padding_mask,
                    coverage, w_dec, b_dec, w_c, v, *, b_blk=None):
    """LuongAttention forward (concat scoring + coverage).

    encoder_out / encoder_hs_features are streamed in their given dtype (pass
    bf16 from the producer to halve HBM traffic); all math is f32 in-kernel.
    w_dec: (2H,2H) torch layout (out,in); b_dec: (2H,); w_c: (2H,1); v: (1,2H).
    """
    B, T, H2 = encoder_out.shape
    enc_itemsize = max(jnp.dtype(encoder_out.dtype).itemsize,
                       jnp.dtype(encoder_hs_features.dtype).itemsize)

    budget = _vmem_budget_bytes()
    if b_blk is None:
        b_blk, B_pad = _pick_b_blk(B, T, H2, enc_itemsize, budget)
    else:
        B_pad = ((B + b_blk - 1) // b_blk) * b_blk

    # decode_projection hoisted to plain XLA: tiny (B,2H)@(2H,2H), frees the
    # W_dec weight (+ its double-buffer accounting) from kernel VMEM.
    s_t_f = jnp.asarray(s_t, jnp.float32)
    dec_feat = s_t_f @ jnp.asarray(w_dec, jnp.float32).T \
        + jnp.asarray(b_dec, jnp.float32)[None, :]               # (B, 2H)

    mask_f = enc_padding_mask.astype(jnp.float32)                # (B, T), 1.0 = pad
    cov_f = jnp.asarray(coverage, jnp.float32)                   # (B, T)
    w_c_row = jnp.asarray(w_c, jnp.float32).reshape(1, H2)       # (1, 2H)
    v_row = jnp.asarray(v, jnp.float32).reshape(1, H2)           # (1, 2H)

    pad = B_pad - B
    if pad:
        # TODO(synk): replace with in-kernel ragged-block masking; padding copies
        # the dominant (B,T,2H) streams through HBM once outside the kernel.
        dec_feat = jnp.pad(dec_feat, ((0, pad), (0, 0)))
        encoder_out = jnp.pad(encoder_out, ((0, pad), (0, 0), (0, 0)))
        encoder_hs_features = jnp.pad(encoder_hs_features, ((0, pad), (0, 0), (0, 0)))
        mask_f = jnp.pad(mask_f, ((0, pad), (0, 0)))
        cov_f = jnp.pad(cov_f, ((0, pad), (0, 0)))

    batch_2d = lambda i: (i, 0)
    batch_3d = lambda i: (i, 0, 0)
    const_2d = lambda i: (0, 0)

    vmem_bytes = int(min(budget,
                         max(_step_vmem_bytes(b_blk, T, H2, enc_itemsize) + (2 << 20),
                             4 << 20)))

    enc_bytes = (jnp.dtype(encoder_out.dtype).itemsize
                 + jnp.dtype(encoder_hs_features.dtype).itemsize) * B_pad * T * H2
    cost = pl.CostEstimate(
        flops=int(8 * B_pad * T * H2),
        transcendentals=int(B_pad * T * H2 + B_pad * T),
        bytes_accessed=int(enc_bytes + 4 * (2 * B_pad * H2 + 4 * B_pad * T + 2 * H2)),
    )

    ctx, att, cov_out = pl.pallas_call(
        _luong_kernel,
        out_shape=(
            jax.ShapeDtypeStruct((B_pad, H2), jnp.float32),   # context
            jax.ShapeDtypeStruct((B_pad, T), jnp.float32),    # att_dist (lane-dense)
            jax.ShapeDtypeStruct((B_pad, T), jnp.float32),    # coverage_new (lane-dense)
        ),
        grid_spec=pltpu.PrefetchScalarGridSpec(
            num_scalar_prefetch=0,
            grid=(B_pad // b_blk,),
            in_specs=[
                pl.BlockSpec((b_blk, H2), batch_2d),          # dec_feat (hoisted proj)
                pl.BlockSpec((b_blk, T, H2), batch_3d),       # encoder_out (native dtype)
                pl.BlockSpec((b_blk, T, H2), batch_3d),       # encoder_hs_features
                pl.BlockSpec((b_blk, T), batch_2d),           # mask (lane-dense)
                pl.BlockSpec((b_blk, T), batch_2d),           # coverage (lane-dense)
                pl.BlockSpec((1, H2), const_2d),              # W_c (row)
                pl.BlockSpec((1, H2), const_2d),              # V (row)
            ],
            out_specs=[
                pl.BlockSpec((b_blk, H2), batch_2d),          # context
                pl.BlockSpec((b_blk, T), batch_2d),           # att_dist
                pl.BlockSpec((b_blk, T), batch_2d),           # coverage_new
            ],
        ),
        compiler_params=pltpu.CompilerParams(
            dimension_semantics=("parallel",),
            vmem_limit_bytes=vmem_bytes),
        cost_estimate=cost,
    )(dec_feat, encoder_out, encoder_hs_features, mask_f, cov_f, w_c_row, v_row)

    return ctx[:B], att[:B], cov_out[:B]


def _reference(s_t, enc_out, enc_feat, mask, cov, w_dec, b_dec, w_c_vec, v_vec):
    dec_feat = s_t @ w_dec.T + b_dec
    attn = enc_feat + dec_feat[:, None, :]
    attn = attn + cov[:, :, None] * w_c_vec.reshape(1, 1, -1)
    attn = jnp.tanh(attn)
    scores = jnp.sum(attn * v_vec.reshape(1, 1, -1), axis=-1)
    scores = jnp.where(mask, -jnp.inf, scores)
    att = jax.nn.softmax(scores, axis=1)
    ctx = jnp.einsum('bt,bth->bh', att, enc_out)
    return ctx, att, cov + att


if __name__ == "__main__":
    B, T, H = 2, 8, 16
    H2 = 2 * H

    key = jax.random.PRNGKey(0)
    ks = jax.random.split(key, 8)
    s_t = jax.random.normal(ks[0], (B, H2), jnp.float32)
    encoder_out = jax.random.normal(ks[1], (B, T, H2), jnp.float32)
    encoder_hs_features = jax.random.normal(ks[2], (B, T, H2), jnp.float32)
    coverage = jax.random.uniform(ks[3], (B, T), jnp.float32)
    # pad mask: last two timesteps of each sequence are padding (True = pad)
    enc_padding_mask = jnp.broadcast_to(jnp.arange(T)[None, :] >= (T - 2), (B, T))

    # Deterministic parameter init (matching module __init__ shapes).
    scale = 1.0 / np.sqrt(H2)
    w_dec = jax.random.uniform(ks[4], (H2, H2), jnp.float32, -scale, scale)  # decode_projection.weight
    b_dec = jax.random.uniform(ks[5], (H2,), jnp.float32, -scale, scale)     # decode_projection.bias
    v = jax.random.uniform(ks[6], (1, H2), jnp.float32, -scale, scale)       # V.weight
    w_c = jax.random.uniform(ks[7], (H2, 1), jnp.float32, -1.0, 1.0)         # W_c.weight
    # encoder_projection is unused in forward(); omitted from the kernel.

    # --- f32 stream path (strict check) ---
    ctx, att, cov_new = luong_attention(
        s_t, encoder_out, encoder_hs_features, enc_padding_mask, coverage,
        w_dec, b_dec, w_c, v)
    jax.block_until_ready((ctx, att, cov_new))

    ctx_r, att_r, cov_r = _reference(
        s_t, encoder_out, encoder_hs_features, enc_padding_mask, coverage,
        w_dec, b_dec, w_c.reshape(-1), v.reshape(-1))
    assert np.allclose(np.asarray(ctx), np.asarray(ctx_r), rtol=1e-5, atol=1e-5)
    assert np.allclose(np.asarray(att), np.asarray(att_r), rtol=1e-5, atol=1e-5)
    assert np.allclose(np.asarray(cov_new), np.asarray(cov_r), rtol=1e-5, atol=1e-5)

    # --- bf16 encoder-stream path (producer supplies bf16; kernel upcasts to f32) ---
    enc_out_bf = encoder_out.astype(jnp.bfloat16)
    enc_feat_bf = encoder_hs_features.astype(jnp.bfloat16)
    ctx_b, att_b, cov_b = luong_attention(
        s_t, enc_out_bf, enc_feat_bf, enc_padding_mask, coverage,
        w_dec, b_dec, w_c, v)
    jax.block_until_ready((ctx_b, att_b, cov_b))

    ctx_rb, att_rb, cov_rb = _reference(
        s_t, enc_out_bf.astype(jnp.float32), enc_feat_bf.astype(jnp.float32),
        enc_padding_mask, coverage, w_dec, b_dec, w_c.reshape(-1), v.reshape(-1))
    assert np.allclose(np.asarray(ctx_b), np.asarray(ctx_rb), rtol=1e-4, atol=1e-4)
    assert np.allclose(np.asarray(att_b), np.asarray(att_rb), rtol=1e-4, atol=1e-4)
    assert np.allclose(np.asarray(cov_b), np.asarray(cov_rb), rtol=1e-4, atol=1e-4)

    print("KERNEL_OK")
</pallas_src>

<mosaic_0001>
module attributes {stable_mosaic.version = 11 : i64} {
  func.func @_luong_kernel(%arg0: i32, %arg1: memref<2x32xf32, #tpu.memory_space<vmem>>, %arg2: memref<2x8x32xf32, #tpu.memory_space<vmem>>, %arg3: memref<2x8x32xf32, #tpu.memory_space<vmem>>, %arg4: memref<2x8xf32, #tpu.memory_space<vmem>>, %arg5: memref<2x8xf32, #tpu.memory_space<vmem>>, %arg6: memref<1x32xf32, #tpu.memory_space<vmem>>, %arg7: memref<1x32xf32, #tpu.memory_space<vmem>>, %arg8: memref<2x32xf32, #tpu.memory_space<vmem>>, %arg9: memref<2x8xf32, #tpu.memory_space<vmem>>, %arg10: memref<2x8xf32, #tpu.memory_space<vmem>>) attributes {dimension_semantics = [#tpu.dimension_semantics<parallel>], iteration_bounds = array<i64: 1>, scalar_prefetch = 0 : i64, scratch_operands = 0 : i64, tpu.core_type = #tpu.core_type<tc>, window_params = [{transform_indices = @transform_0, window_bounds = array<i64: 2, 32>}, {transform_indices = @transform_1, window_bounds = array<i64: 2, 8, 32>}, {transform_indices = @transform_2, window_bounds = array<i64: 2, 8, 32>}, {transform_indices = @transform_3, window_bounds = array<i64: 2, 8>}, {transform_indices = @transform_4, window_bounds = array<i64: 2, 8>}, {pipeline_mode = #tpu.pipeline_mode<synchronous>, transform_indices = @transform_5, window_bounds = array<i64: 1, 32>}, {pipeline_mode = #tpu.pipeline_mode<synchronous>, transform_indices = @transform_6, window_bounds = array<i64: 1, 32>}, {transform_indices = @transform_7, window_bounds = array<i64: 2, 32>}, {transform_indices = @transform_8, window_bounds = array<i64: 2, 8>}, {transform_indices = @transform_9, window_bounds = array<i64: 2, 8>}]} {
    %c0 = arith.constant 0 : index
    %c0_0 = arith.constant 0 : index
    %0 = vector.load %arg1[%c0, %c0_0] : memref<2x32xf32, #tpu.memory_space<vmem>>, vector<2x32xf32>
    %c0_1 = arith.constant 0 : index
    %c0_2 = arith.constant 0 : index
    %c0_3 = arith.constant 0 : index
    %1 = vector.load %arg3[%c0_1, %c0_2, %c0_3] : memref<2x8x32xf32, #tpu.memory_space<vmem>>, vector<2x8x32xf32>
    %c0_4 = arith.constant 0 : index
    %c0_5 = arith.constant 0 : index
    %2 = vector.load %arg5[%c0_4, %c0_5] : memref<2x8xf32, #tpu.memory_space<vmem>>, vector<2x8xf32>
    %3 = vector.shape_cast %0 : vector<2x32xf32> to vector<2x1x32xf32>
    %4 = vector.broadcast %3 : vector<2x1x32xf32> to vector<2x8x32xf32>
    %5 = arith.addf %1, %4 : vector<2x8x32xf32>
    %6 = vector.shape_cast %2 : vector<2x8xf32> to vector<2x8x1xf32>
    %c0_6 = arith.constant 0 : index
    %c0_7 = arith.constant 0 : index
    %7 = vector.load %arg6[%c0_6, %c0_7] : memref<1x32xf32, #tpu.memory_space<vmem>>, vector<1x32xf32>
    %8 = vector.shape_cast %7 : vector<1x32xf32> to vector<1x1x32xf32>
    %9 = vector.broadcast %6 : vector<2x8x1xf32> to vector<2x8x32xf32>
    %10 = vector.broadcast %8 : vector<1x1x32xf32> to vector<2x8x32xf32>
    %11 = arith.mulf %9, %10 : vector<2x8x32xf32>
    %12 = arith.addf %5, %11 : vector<2x8x32xf32>
    %13 = math.tanh %12 : vector<2x8x32xf32>
    %c0_8 = arith.constant 0 : index
    %c0_9 = arith.constant 0 : index
    %14 = vector.load %arg7[%c0_8, %c0_9] : memref<1x32xf32, #tpu.memory_space<vmem>>, vector<1x32xf32>
    %15 = vector.shape_cast %14 : vector<1x32xf32> to vector<1x1x32xf32>
    %16 = vector.broadcast %15 : vector<1x1x32xf32> to vector<2x8x32xf32>
    %17 = arith.mulf %13, %16 : vector<2x8x32xf32>
    %cst = arith.constant dense<0.000000e+00> : vector<2x8xf32>
    %18 = vector.multi_reduction <add>, %17, %cst [2] : vector<2x8x32xf32> to vector<2x8xf32>
    %c0_10 = arith.constant 0 : index
    %c0_11 = arith.constant 0 : index
    %19 = vector.load %arg4[%c0_10, %c0_11] : memref<2x8xf32, #tpu.memory_space<vmem>>, vector<2x8xf32>
    %cst_12 = arith.constant 5.000000e-01 : f32
    %20 = vector.broadcast %cst_12 : f32 to vector<2x8xf32>
    %21 = arith.cmpf ogt, %19, %20 : vector<2x8xf32>
    %cst_13 = arith.constant -1.000000e+30 : f32
    %22 = vector.broadcast %cst_13 : f32 to vector<2x8xf32>
    %23 = arith.select %21, %22, %18 : vector<2x8xi1>, vector<2x8xf32>
    %cst_14 = arith.constant dense<0xFF800000> : vector<2xf32>
    %24 = vector.multi_reduction <maximumf>, %23, %cst_14 [1] : vector<2x8xf32> to vector<2xf32>
    %25 = vector.shape_cast %24 : vector<2xf32> to vector<2x1xf32>
    %26 = vector.broadcast %25 : vector<2x1xf32> to vector<2x8xf32>
    %27 = arith.subf %23, %26 : vector<2x8xf32>
    %28 = math.exp %27 : vector<2x8xf32>
    %cst_15 = arith.constant dense<0.000000e+00> : vector<2xf32>
    %29 = vector.multi_reduction <add>, %28, %cst_15 [1] : vector<2x8xf32> to vector<2xf32>
    %30 = vector.shape_cast %29 : vector<2xf32> to vector<2x1xf32>
    %31 = vector.broadcast %30 : vector<2x1xf32> to vector<2x8xf32>
    %32 = arith.divf %28, %31 : vector<2x8xf32>
    %c0_16 = arith.constant 0 : index
    %c0_17 = arith.constant 0 : index
    %c0_18 = arith.constant 0 : index
    %33 = vector.load %arg2[%c0_16, %c0_17, %c0_18] : memref<2x8x32xf32, #tpu.memory_space<vmem>>, vector<2x8x32xf32>
    %34 = vector.shape_cast %32 : vector<2x8xf32> to vector<2x8x1xf32>
    %35 = vector.broadcast %34 : vector<2x8x1xf32> to vector<2x8x32xf32>
    %36 = arith.mulf %35, %33 : vector<2x8x32xf32>
    %cst_19 = arith.constant dense<0.000000e+00> : vector<2x32xf32>
    %37 = vector.multi_reduction <add>, %36, %cst_19 [1] : vector<2x8x32xf32> to vector<2x32xf32>
    %c0_20 = arith.constant 0 : index
    %c0_21 = arith.constant 0 : index
    %38 = vector.load %arg8[%c0_20, %c0_21] : memref<2x32xf32, #tpu.memory_space<vmem>>, vector<2x32xf32>
    tpu.vector_store %arg8[%c0_20, %c0_21], %37 {strides = array<i32>} : memref<2x32xf32, #tpu.memory_space<vmem>>, vector<2x32xf32>,
    %c0_22 = arith.constant 0 : index
    %c0_23 = arith.constant 0 : index
    %39 = vector.load %arg9[%c0_22, %c0_23] : memref<2x8xf32, #tpu.memory_space<vmem>>, vector<2x8xf32>
    tpu.vector_store %arg9[%c0_22, %c0_23], %32 {strides = array<i32>} : memref<2x8xf32, #tpu.memory_space<vmem>>, vector<2x8xf32>,
    %40 = arith.addf %2, %32 : vector<2x8xf32>
    %c0_24 = arith.constant 0 : index
    %c0_25 = arith.constant 0 : index
    %41 = vector.load %arg10[%c0_24, %c0_25] : memref<2x8xf32, #tpu.memory_space<vmem>>, vector<2x8xf32>
    tpu.vector_store %arg10[%c0_24, %c0_25], %40 {strides = array<i32>} : memref<2x8xf32, #tpu.memory_space<vmem>>, vector<2x8xf32>,
    return
  }
  func.func @transform_0(%arg0: i32) -> (i32, i32) {
    %c0_i32 = arith.constant 0 : i32
    %c0_i32_0 = arith.constant 0 : i32
    return %arg0, %c0_i32 : i32, i32
  }
  func.func @transform_1(%arg0: i32) -> (i32, i32, i32) {
    %c0_i32 = arith.constant 0 : i32
    %c0_i32_0 = arith.constant 0 : i32
    %c0_i32_1 = arith.constant 0 : i32
    return %arg0, %c0_i32, %c0_i32_0 : i32, i32, i32
  }
  func.func @transform_2(%arg0: i32) -> (i32, i32, i32) {
    %c0_i32 = arith.constant 0 : i32
    %c0_i32_0 = arith.constant 0 : i32
    %c0_i32_1 = arith.constant 0 : i32
    return %arg0, %c0_i32, %c0_i32_0 : i32, i32, i32
  }
  func.func @transform_3(%arg0: i32) -> (i32, i32) {
    %c0_i32 = arith.constant 0 : i32
    %c0_i32_0 = arith.constant 0 : i32
    return %arg0, %c0_i32 : i32, i32
  }
  func.func @transform_4(%arg0: i32) -> (i32, i32) {
    %c0_i32 = arith.constant 0 : i32
    %c0_i32_0 = arith.constant 0 : i32
    return %arg0, %c0_i32 : i32, i32
  }
  func.func @transform_5(%arg0: i32) -> (i32, i32) {
    %c0_i32 = arith.constant 0 : i32
    %c0_i32_0 = arith.constant 0 : i32
    %c0_i32_1 = arith.constant 0 : i32
    return %c0_i32, %c0_i32_0 : i32, i32
  }
  func.func @transform_6(%arg0: i32) -> (i32, i32) {
    %c0_i32 = arith.constant 0 : i32
    %c0_i32_0 = arith.constant 0 : i32
    %c0_i32_1 = arith.constant 0 : i32
    return %c0_i32, %c0_i32_0 : i32, i32
  }
  func.func @transform_7(%arg0: i32) -> (i32, i32) {
    %c0_i32 = arith.constant 0 : i32
    %c0_i32_0 = arith.constant 0 : i32
    return %arg0, %c0_i32 : i32, i32
  }
  func.func @transform_8(%arg0: i32) -> (i32, i32) {
    %c0_i32 = arith.constant 0 : i32
    %c0_i32_0 = arith.constant 0 : i32
    return %arg0, %c0_i32 : i32, i32
  }
  func.func @transform_9(%arg0: i32) -> (i32, i32) {
    %c0_i32 = arith.constant 0 : i32
    %c0_i32_0 = arith.constant 0 : i32
    return %arg0, %c0_i32 : i32, i32
  }
}

</mosaic_0001>

<llo_original>
// kernel: tpu_custom_call.1
$region0: #{tpu_custom_call.1}
  #allocation0 [shape = 'u32[]', space=smem, size = 0x4, offset = 0x4, fixed_abs, tag = 'smem constant byte address 0x4 - core index']
  #allocation1 [shape = 'u32[72,128]{1,0:T(1,128)}', space=vmem, size = 0x9000, scoped, tag = 'internal scratch']
  %s0 = inlined_call_operand.hbm [shape: f32[2,32], index: 0, kind: input, shape index: {}]
  %s1 = inlined_call_operand.hbm [shape: f32[2,8,32], index: 1, kind: input, shape index: {}]
  %s2 = inlined_call_operand.hbm [shape: f32[2,8,32], index: 2, kind: input, shape index: {}]
  %s3 = inlined_call_operand.vmem [shape: f32[2,8], index: 3, kind: input, shape index: {}]
  %s4 = inlined_call_operand.hbm [shape: f32[2,8], index: 4, kind: input, shape index: {}]
  %s5 = inlined_call_operand.vmem [shape: f32[1,32], index: 5, kind: input, shape index: {}]
  %s6 = inlined_call_operand.vmem [shape: f32[1,32], index: 6, kind: input, shape index: {}]
  %s7 = inlined_call_operand.hbm [shape: f32[2,32], index: 7, kind: output, shape index: {0}]
  %s8 = inlined_call_operand.hbm [shape: f32[2,8], index: 8, kind: output, shape index: {1}]
  %s9 = inlined_call_operand.hbm [shape: f32[2,8], index: 9, kind: output, shape index: {2}]
  %10 = xla_tuple %s7, %s8, %s9
  %s11 = sld [smem:[#allocation0]]
  $region70: #{tpu_custom_call.1} parent=0
    _
  %s13 = ssub.s32 1, %s11
  %s14 = scalar_select 0, %s13, %s11
  $region1: #{tpu_custom_call.1} parent=0
    #allocation2 [shape = 'u8[1024]{0}', space=vmem, size = 0x400, scoped, tag = 'input window, operand 0, single buffered']
    #allocation3 [shape = 's32[1]{0}', space=sflag, size = 0x4, scoped, tag = 'scoped memory for tpu_custom_call.1']
    #allocation4 [shape = 's32[1]{0}', space=sflag, size = 0x4, scoped, tag = 'scoped memory for tpu_custom_call.1']
    #allocation5 [shape = 'u8[8192]{0}', space=vmem, size = 0x2000, scoped, tag = 'input window, operand 1, single buffered']
    #allocation6 [shape = 's32[1]{0}', space=sflag, size = 0x4, scoped, tag = 'scoped memory for tpu_custom_call.1']
    #allocation7 [shape = 'u8[8192]{0}', space=vmem, size = 0x2000, scoped, tag = 'input window, operand 2, single buffered']
    #allocation8 [shape = 'u8[1024]{0}', space=vmem, size = 0x400, scoped, tag = 'input window, operand 4, single buffered']
    #allocation9 [shape = 's32[1]{0}', space=sflag, size = 0x4, scoped, tag = 'scoped memory for tpu_custom_call.1']
    #allocation10 [shape = 'u8[1024]{0}', space=vmem, size = 0x400, scoped, tag = 'output window, operand 0, single buffered']
    #allocation11 [shape = 'u8[1024]{0}', space=vmem, size = 0x400, scoped, tag = 'output window, operand 1, single buffered']
    #allocation12 [shape = 's32[1]{0}', space=sflag, size = 0x4, scoped, tag = 'scoped memory for tpu_custom_call.1']
    #allocation13 [shape = 'u8[1024]{0}', space=vmem, size = 0x400, scoped, tag = 'output window, operand 2, single buffered']
    %15 = vsyncpa [#allocation3], 0
    %16 = vsyncpa [#allocation6], 0
    %17 = vsyncpa [#allocation9], 0
    %18 = vsyncpa [#allocation4], 0
    %19 = vsyncpa [#allocation12], 0
    // Predicated region
    $region2: #{tpu_custom_call.1} parent=1 // pred_check
      _
    $region3: #{tpu_custom_call.1} parent=1 // pred_check_branch
      %21 = sbr.rel (0) target = $region5
    $region4: #{tpu_custom_call.1} parent=1 // pred_region
      %23 = vsyncadd [#allocation3], 0
      %s25 = sshll.u32 %s0, 4
      %s26 = int_to_ptr.hbm [resolvable:$true] %s25
      %s27 = sshll.u32 [#allocation2], 4
      %s28 = int_to_ptr.vmem [resolvable:$true] %s27
      %30 = dma.hbm_to_vmem [thread:$0]  %s26, 32, %s28, [#allocation3]
    $region5: #{tpu_custom_call.1} parent=1 // pred_fallthru
      _
    // Predicated region
    $region6: #{tpu_custom_call.1} parent=1 // pred_check
      _
    $region7: #{tpu_custom_call.1} parent=1 // pred_check_branch
      %32 = sbr.rel (0) target = $region9
    $region8: #{tpu_custom_call.1} parent=1 // pred_region
      %34 = vsyncadd [#allocation6], 0
      %s35 = sshll.u32 %s1, 4
      %s36 = int_to_ptr.hbm [resolvable:$true] %s35
      %s37 = sshll.u32 [#allocation5], 4
      %s38 = int_to_ptr.vmem [resolvable:$true] %s37
      %43 = dma.hbm_to_vmem [thread:$0]  %s36, 256, %s38, [#allocation6], 128, 128, 8
    $region9: #{tpu_custom_call.1} parent=1 // pred_fallthru
      _
    // Predicated region
    $region10: #{tpu_custom_call.1} parent=1 // pred_check
      _
    $region11: #{tpu_custom_call.1} parent=1 // pred_check_branch
      %45 = sbr.rel (0) target = $region13
    $region12: #{tpu_custom_call.1} parent=1 // pred_region
      %47 = vsyncadd [#allocation6], 0
      %s48 = sshll.u32 %s2, 4
      %s49 = int_to_ptr.hbm [resolvable:$true] %s48
      %s50 = sshll.u32 [#allocation7], 4
      %s51 = int_to_ptr.vmem [resolvable:$true] %s50
      %56 = dma.hbm_to_vmem [thread:$0]  %s49, 256, %s51, [#allocation6], 128, 128, 8
    $region13: #{tpu_custom_call.1} parent=1 // pred_fallthru
      _
    // Predicated region
    $region14: #{tpu_custom_call.1} parent=1 // pred_check
      _
    $region15: #{tpu_custom_call.1} parent=1 // pred_check_branch
      %58 = sbr.rel (0) target = $region17
    $region16: #{tpu_custom_call.1} parent=1 // pred_region
      _
    $region17: #{tpu_custom_call.1} parent=1 // pred_fallthru
      _
    // Predicated region
    $region18: #{tpu_custom_call.1} parent=1 // pred_check
      _
    $region19: #{tpu_custom_call.1} parent=1 // pred_check_branch
      %60 = sbr.rel (0) target = $region21
    $region20: #{tpu_custom_call.1} parent=1 // pred_region
      %62 = vsyncadd [#allocation9], 0
      %s64 = sshll.u32 %s4, 4
      %s65 = int_to_ptr.hbm [resolvable:$true] %s64
      %s66 = sshll.u32 [#allocation8], 4
      %s67 = int_to_ptr.vmem [resolvable:$true] %s66
      %69 = dma.hbm_to_vmem [thread:$0]  %s65, 32, %s67, [#allocation9]
    $region21: #{tpu_custom_call.1} parent=1 // pred_fallthru
      _
    // Predicated region
    $region22: #{tpu_custom_call.1} parent=1 // pred_check
      _
    $region23: #{tpu_custom_call.1} parent=1 // pred_check_branch
      %71 = sbr.rel (0) target = $region25
    $region24: #{tpu_custom_call.1} parent=1 // pred_region
      _
    $region25: #{tpu_custom_call.1} parent=1 // pred_fallthru
      _
    // Predicated region
    $region26: #{tpu_custom_call.1} parent=1 // pred_check
      _
    $region27: #{tpu_custom_call.1} parent=1 // pred_check_branch
      %73 = sbr.rel (0) target = $region29
    $region28: #{tpu_custom_call.1} parent=1 // pred_region
      _
    $region29: #{tpu_custom_call.1} parent=1 // pred_fallthru
      _
    // Predicated region
    $region30: #{tpu_custom_call.1} parent=1 // pred_check
      _
    $region31: #{tpu_custom_call.1} parent=1 // pred_check_branch
      %75 = sbr.rel (0) target = $region33
    $region32: #{tpu_custom_call.1} parent=1 // pred_region
      %77 = dma.done [#allocation3], 32
    $region33: #{tpu_custom_call.1} parent=1 // pred_fallthru
      _
    // Predicated region
    $region34: #{tpu_custom_call.1} parent=1 // pred_check
      _
    $region35: #{tpu_custom_call.1} parent=1 // pred_check_branch
      %79 = sbr.rel (0) target = $region37
    $region36: #{tpu_custom_call.1} parent=1 // pred_region
      %81 = dma.done [#allocation6], 256
    $region37: #{tpu_custom_call.1} parent=1 // pred_fallthru
      _
    // Predicated region
    $region38: #{tpu_custom_call.1} parent=1 // pred_check
      _
    $region39: #{tpu_custom_call.1} parent=1 // pred_check_branch
      %83 = sbr.rel (0) target = $region41
    $region40: #{tpu_custom_call.1} parent=1 // pred_region
      %85 = dma.done [#allocation6], 256
    $region41: #{tpu_custom_call.1} parent=1 // pred_fallthru
      _
    // Predicated region
    $region42: #{tpu_custom_call.1} parent=1 // pred_check
      _
    $region43: #{tpu_custom_call.1} parent=1 // pred_check_branch
      %87 = sbr.rel (0) target = $region45
    $region44: #{tpu_custom_call.1} parent=1 // pred_region
      %89 = dma.done [#allocation9], 32
    $region45: #{tpu_custom_call.1} parent=1 // pred_fallthru
      _
    %v90 = vld [vmem:[#allocation2] sm:$0x3]
    %v91 = vld [vmem:[#allocation7] sm:$0xff]
    %v92 = vld [vmem:[#allocation7 + $0x8] sm:$0xff]
    %v93 = vld [vmem:[#allocation8] sm:$0x3]
    %v95 = vrot.slane %v90, 1
    %v96 = vperm.slane %v90, 0
    %v97 = vperm.slane %v95, 0
    %v100 = vadd.f32 %v91, %v96
    %v101 = vadd.f32 %v92, %v97
    %v102 = vperm.slane %v93, 0
    %v103 = vlaneseq
    %v104 = vshrl.u32 %v103, 7
    %106 = vset.pattern.permute.xlu0 %v104
    %107 = vperm.xlu0 %106, %v102
    %v108 = vpop.permute.xlu0 %107
    %v109 = vperm.slane %v93, 1
    %v110 = vlaneseq
    %v111 = vshrl.u32 %v110, 7
    %113 = vset.pattern.permute.xlu0 %v111
    %114 = vperm.xlu0 %113, %v109
    %v115 = vpop.permute.xlu0 %114
    %v116 = vld [vmem:[%s5] sm:$0x1]
    %v118 = vperm.slane %v116, 0
    %v120 = vmul.f32 %v108, %v118
    %v121 = vmul.f32 %v115, %v118
    %v122 = vadd.f32 %v100, %v120
    %v123 = vadd.f32 %v101, %v121
    %v124 = vtanh.pop %v122
    %v125 = vtanh.pop %v123
    %v126 = vld [vmem:[%s6] sm:$0x1]
    %v128 = vperm.slane %v126, 0
    %v130 = vmul.f32 %v124, %v128
    %v131 = vmul.f32 %v125, %v128
    %vm132 = vcmask 261120
    %v133 = vsel %vm132, %v130, 0.0
    %134 = vadd.xlane.f32.xlu0 %v133
    %v135 = vpop.xlane.xlu0 %134
    %v136 = vsel %vm132, %v131, 0.0
    %137 = vadd.xlane.f32.xlu0 %v136
    %v138 = vpop.xlane.xlu0 %137
    %v139 = vld [vmem:[%s3] sm:$0x3]
    %vm140 = vcmp.gt.f32.partialorder %v139, 0.5
    %v143 = vlaneseq
    %v144 = vand.u32 %v143, 127
    %v145 = vperm.slane %v135, %v144
    %v146 = vperm.slane %v138, %v144
    %vm147 = vcmask 1041409
    %v148 = vsel %vm147, %v146, %v145
    %v150 = vsel %vm140, -1e+30, %v148
    %vm151 = vcmask 58368
    %v152 = vsel %vm151, %v150, -inf
    %153 = vmax.xlane.f32.xlu0 %v152
    %v154 = vpop.xlane.xlu0 %153
    %v155 = vsub.f32 %v150, %v154
    %v156 = vmul.f32 %v155, 1.442695
    %v157 = vpow.pop %v156
    %v158 = vsel %vm151, %v157, 0.0
    %159 = vadd.xlane.f32.xlu0 %v158
    %v160 = vpop.xlane.xlu0 %159
    %v161 = vrcp.pop %v160
    %v162 = vmul.f32 %v160, %v161
    %v163 = vsub.f32 1.0, %v162
    %v164 = vmul.f32 %v161, %v163
    %v165 = vadd.f32 %v161, %v164
    %vm166 = vweird.f32 %v160
    %vm167 = vweird.f32 %v161
    %vm168 = vmor %vm166, %vm167
    %v169 = vsel %vm168, %v161, %v165
    %v170 = vand.u32 2147483647, %v160
    %vm171 = vcmp.eq.f32.partialorder %v170, 8.507059e+37
    %v172 = vand.u32 %v160, 2147483648
    %v173 = vor.u32 1.1754944e-38, %v172
    %v174 = vsel %vm171, %v173, %v169
    %v175 = vmul.f32 %v157, %v174
    %v176 = vld [vmem:[#allocation5] sm:$0xff]
    %v177 = vld [vmem:[#allocation5 + $0x8] sm:$0xff]
    %v178 = vperm.slane %v175, 0
    %v179 = vlaneseq
    %v180 = vshrl.u32 %v179, 7
    %182 = vset.pattern.permute.xlu0 %v180
    %183 = vperm.xlu0 %182, %v178
    %v184 = vpop.permute.xlu0 %183
    %v185 = vperm.slane %v175, 1
    %v186 = vlaneseq
    %v187 = vshrl.u32 %v186, 7
    %189 = vset.pattern.permute.xlu0 %v187
    %190 = vperm.xlu0 %189, %v185
    %v191 = vpop.permute.xlu0 %190
    %v192 = vmul.f32 %v184, %v176
    %v193 = vmul.f32 %v191, %v177
    %v194 = vsel %vm132, %v192, 0.0
    %v195 = vrot.slane %v194, 4
    %v196 = vadd.f32 %v194, %v195
    %v197 = vrot.slane %v196, 2
    %v198 = vadd.f32 %v196, %v197
    %v199 = vrot.slane %v198, 1
    %v200 = vadd.f32 %v198, %v199
    %v201 = vsel %vm132, %v193, 0.0
    %v202 = vrot.slane %v201, 4
    %v203 = vadd.f32 %v201, %v202
    %v204 = vrot.slane %v203, 2
    %v205 = vadd.f32 %v203, %v204
    %v206 = vrot.slane %v205, 1
    %v207 = vadd.f32 %v205, %v206
    %v210 = vsel %vm147, %v207, %v200
    %vm212 = vcmask 254976
    %213 = vst.msk [vmem:[#allocation10] sm:$0x3] %vm212, %v210
    %214 = vst.msk [vmem:[#allocation11] sm:$0x3] %vm151, %v175
    %v215 = vadd.f32 %v93, %v175
    %216 = vst.msk [vmem:[#allocation13] sm:$0x3] %vm151, %v215
    // Predicated region
    $region46: #{tpu_custom_call.1} parent=1 // pred_check
      _
    $region47: #{tpu_custom_call.1} parent=1 // pred_check_branch
      %218 = sbr.rel (0) target = $region49
    $region48: #{tpu_custom_call.1} parent=1 // pred_region
      %220 = vsyncadd [#allocation4], 0
      %s222 = sshll.u32 [#allocation10], 4
      %s223 = int_to_ptr.vmem [resolvable:$true] %s222
      %s224 = sshll.u32 %s7, 4
      %s225 = int_to_ptr.hbm [resolvable:$true] %s224
      %227 = dma.vmem_to_hbm [thread:$0]  %s223, 32, %s225, [#allocation4]
    $region49: #{tpu_custom_call.1} parent=1 // pred_fallthru
      _
    // Predicated region
    $region50: #{tpu_custom_call.1} parent=1 // pred_check
      _
    $region51: #{tpu_custom_call.1} parent=1 // pred_check_branch
      %229 = sbr.rel (0) target = $region53
    $region52: #{tpu_custom_call.1} parent=1 // pred_region
      %231 = vsyncadd [#allocation12], 0
      %s233 = sshll.u32 [#allocation11], 4
      %s234 = int_to_ptr.vmem [resolvable:$true] %s233
      %s235 = sshll.u32 %s8, 4
      %s236 = int_to_ptr.hbm [resolvable:$true] %s235
      %238 = dma.vmem_to_hbm [thread:$0]  %s234, 32, %s236, [#allocation12]
    $region53: #{tpu_custom_call.1} parent=1 // pred_fallthru
      _
    // Predicated region
    $region54: #{tpu_custom_call.1} parent=1 // pred_check
      _
    $region55: #{tpu_custom_call.1} parent=1 // pred_check_branch
      %240 = sbr.rel (0) target = $region57
    $region56: #{tpu_custom_call.1} parent=1 // pred_region
      %242 = vsyncadd [#allocation12], 0
      %s244 = sshll.u32 [#allocation13], 4
      %s245 = int_to_ptr.vmem [resolvable:$true] %s244
      %s246 = sshll.u32 %s9, 4
      %s247 = int_to_ptr.hbm [resolvable:$true] %s246
      %249 = dma.vmem_to_hbm [thread:$0]  %s245, 32, %s247, [#allocation12]
    $region57: #{tpu_custom_call.1} parent=1 // pred_fallthru
      _
    // Predicated region
    $region58: #{tpu_custom_call.1} parent=1 // pred_check
      _
    $region59: #{tpu_custom_call.1} parent=1 // pred_check_branch
      %251 = sbr.rel (0) target = $region61
    $region60: #{tpu_custom_call.1} parent=1 // pred_region
      %253 = dma.done [#allocation4], 32
    $region61: #{tpu_custom_call.1} parent=1 // pred_fallthru
      _
    // Predicated region
    $region62: #{tpu_custom_call.1} parent=1 // pred_check
      _
    $region63: #{tpu_custom_call.1} parent=1 // pred_check_branch
      %255 = sbr.rel (0) target = $region65
    $region64: #{tpu_custom_call.1} parent=1 // pred_region
      %257 = dma.done [#allocation12], 32
    $region65: #{tpu_custom_call.1} parent=1 // pred_fallthru
      _
    // Predicated region
    $region66: #{tpu_custom_call.1} parent=1 // pred_check
      _
    $region67: #{tpu_custom_call.1} parent=1 // pred_check_branch
      %259 = sbr.rel (0) target = $region69
    $region68: #{tpu_custom_call.1} parent=1 // pred_region
      %261 = dma.done [#allocation12], 32
    $region69: #{tpu_custom_call.1} parent=1 // pred_fallthru
      _
    %262 = vsyncpa [#allocation3], 1
    %263 = vsyncpa [#allocation6], 1
    %264 = vsyncpa [#allocation9], 1
    %265 = vsyncpa [#allocation4], 1
    %266 = vsyncpa [#allocation12], 1

</llo_original>
